<compile_context>
chip_gen: v7x
topology: tpu7x:2x2x1
jax: 0.10.0
libtpu: 0.0.40
codegen_flags: <defaults>
</compile_context>

<pallas_src>
import functools

import jax
import jax.numpy as jnp
from jax.experimental import pallas as pl
from jax.experimental.pallas import tpu as pltpu

LANE = 128   # vreg lane width
SUB = 8      # vreg sublane width


def _round_up(n, m):
    return ((n + m - 1) // m) * m


def _cdiv(a, b):
    return -(-a // b)


def _pad2(a, rows, cols):
    return jnp.pad(a, ((0, rows - a.shape[0]), (0, cols - a.shape[1])))


def pack_params(w1, b1, w2, b2, w3, b3, param_dtype=jnp.float32):
    """Pack all 6 parameter arrays into ONE padded slab (call once, reuse).

    Row layout:
      [0,            d_in_p)          w1 : (d_in_p, P)
      [d_in_p,       d_in_p +  P)     w2 : (P, P)
      [d_in_p +  P,  d_in_p + 2P)     w3 : (P, P)
      [d_in_p + 2P,  d_in_p + 2P + 8) bias block: row0=b1, row1=b2, row2=b3

    INVARIANT: every padded row/col/lane is exactly 0 and the hidden
    activation is ReLU (0 -> 0), so padded hidden lanes stay exactly 0 through
    all layers and can never leak into the first n_out output lanes.  Changing
    the pad value or the activation breaks this.
    """
    d_in, hidden = w1.shape
    n_out = w3.shape[1]
    d_in_p = _round_up(d_in, SUB)
    P = _round_up(max(hidden, n_out), LANE)

    bias = jnp.zeros((SUB, P), jnp.float32)
    bias = bias.at[0, :hidden].set(b1.reshape(-1))
    bias = bias.at[1, :hidden].set(b2.reshape(-1))
    bias = bias.at[2, :n_out].set(b3.reshape(-1))

    slab = jnp.concatenate(
        [
            _pad2(w1, d_in_p, P),
            _pad2(w2, P, P),
            _pad2(w3, P, P),
            bias,
        ],
        axis=0,
    )
    return slab.astype(param_dtype)


def _make_mlp_kernel(d_in_p, p, n_out):
    """Fused 3-layer MLP kernel with static slab row offsets."""
    r_w1 = 0
    r_w2 = d_in_p
    r_w3 = d_in_p + p
    r_b = d_in_p + 2 * p   # sublane-aligned 8-row bias block

    def kernel(x_ref, p_ref, o_ref):
        w1 = p_ref[r_w1:r_w1 + d_in_p, :]   # (d_in_p, P)
        w2 = p_ref[r_w2:r_w2 + p, :]        # (P, P)
        w3 = p_ref[r_w3:r_w3 + p, :]        # (P, P)
        bias = p_ref[r_b:r_b + SUB, :]      # (8, P): rows 0/1/2 = b1/b2/b3
        b1 = bias[0:1, :]
        b2 = bias[1:2, :]
        b3 = bias[2:3, :]

        x = x_ref[...]
        # Layer 1: Linear + ReLU (MXU matmul, f32 accumulate; bias/ReLU in f32).
        h = jnp.dot(x, w1, preferred_element_type=jnp.float32) + b1
        h = jnp.maximum(h, 0.0)
        # Layer 2: Linear + ReLU.
        h = jnp.dot(h.astype(w2.dtype), w2, preferred_element_type=jnp.float32) + b2
        h = jnp.maximum(h, 0.0)
        # Layer 3: Linear (no activation).  Store only the real n_out lanes
        # (masked store) -- avoids 128-lane writeback inflation + a post-slice.
        out = jnp.dot(h.astype(w3.dtype), w3, preferred_element_type=jnp.float32) + b3
        o_ref[...] = out[:, :n_out].astype(o_ref.dtype)

    return kernel


@functools.partial(jax.jit, static_argnames=("n_out", "max_tile_b", "min_tiles"))
def estimator_forward(x, slab, *, n_out, max_tile_b=512, min_tiles=2):
    """Forward pass.  x: (B, d_in) f32; slab: output of pack_params()."""
    B, d_in = x.shape
    P = slab.shape[1]
    d_in_p = slab.shape[0] - 2 * P - SUB

    # Balanced batch tiling: minimal padding (<8 rows/tile); >=2 tiles when
    # B > 8 so v7x's two TensorCores both get work on the "parallel" axis.
    n_tiles = _cdiv(B, max_tile_b)
    if B > SUB:
        n_tiles = max(n_tiles, min_tiles)
    n_tiles = min(n_tiles, _cdiv(B, SUB))   # keep tiles >= 8 rows
    tile_b = _round_up(_cdiv(B, n_tiles), SUB)
    b_pad = n_tiles * tile_b

    # Only copy x if padding is actually required (skipped whenever B is a
    # multiple of tile_b and d_in is already sublane-aligned).
    x_p = x
    if (b_pad != B) or (d_in_p != d_in):
        x_p = jnp.pad(x, ((0, b_pad - B), (0, d_in_p - d_in)))
    if x_p.dtype != slab.dtype:
        x_p = x_p.astype(slab.dtype)   # bf16 activation path (opt-in)

    # Set an explicit VMEM limit only when the footprint nears the default
    # scoped limit (guards v7x / big hidden; no-op for the small shapes here).
    itemsize = slab.dtype.itemsize
    est_vmem = (2 * tile_b * d_in_p * itemsize      # x tile, double-buffered
                + 2 * tile_b * n_out * 4            # out tile, double-buffered
                + 2 * slab.shape[0] * P * itemsize  # resident slab (2 bufs)
                + 4 * tile_b * P * 4)               # live f32 intermediates
    cp_kwargs = dict(dimension_semantics=("parallel",))
    if est_vmem > 24 * 1024 * 1024:
        cp_kwargs["vmem_limit_bytes"] = min(2 * est_vmem, 100 * 1024 * 1024)

    kernel = _make_mlp_kernel(d_in_p, P, n_out)
    out_p = pl.pallas_call(
        kernel,
        out_shape=jax.ShapeDtypeStruct((b_pad, n_out), jnp.float32),
        grid=(n_tiles,),
        in_specs=[
            pl.BlockSpec((tile_b, d_in_p), lambda i: (i, 0)),
            # Constant block index -> params DMA'd once, stay VMEM-resident.
            pl.BlockSpec(slab.shape, lambda i: (0, 0)),
        ],
        out_specs=pl.BlockSpec((tile_b, n_out), lambda i: (i, 0)),
        compiler_params=pltpu.CompilerParams(**cp_kwargs),
    )(x_p, slab)

    return out_p if b_pad == B else out_p[:B]


def _init_linear(key, in_dim, out_dim):
    # Matches torch.nn.Linear's U(-1/sqrt(fan_in), +1/sqrt(fan_in)) init.
    kw, kb = jax.random.split(key)
    bound = 1.0 / jnp.sqrt(jnp.float32(in_dim))
    w = jax.random.uniform(kw, (in_dim, out_dim), jnp.float32, -bound, bound)
    b = jax.random.uniform(kb, (1, out_dim), jnp.float32, -bound, bound)
    return w, b


def _reference(x, w1, b1, w2, b2, w3, b3):
    h = jnp.maximum(x @ w1 + b1, 0.0)
    h = jnp.maximum(h @ w2 + b2, 0.0)
    return h @ w3 + b3


if __name__ == "__main__":
    # Config-implied small shapes.
    batch = 8
    seq_len = 8
    n_input_feature = 4
    hidden_size = 32
    n_output = 4
    d_in = seq_len * n_input_feature  # 32

    key = jax.random.PRNGKey(0)
    kx, k1, k2, k3, kx2 = jax.random.split(key, 5)

    x = jax.random.normal(kx, (batch, d_in), jnp.float32)
    w1, b1 = _init_linear(k1, d_in, hidden_size)
    w2, b2 = _init_linear(k2, hidden_size, hidden_size)
    w3, b3 = _init_linear(k3, hidden_size, n_output)

    # Pack parameters ONCE (hoisted out of the forward; reused every call).
    slab = pack_params(w1, b1, w2, b2, w3, b3)

    out = estimator_forward(x, slab, n_out=n_output)
    out = jax.block_until_ready(out)
    ref = _reference(x, w1, b1, w2, b2, w3, b3)
    assert out.shape == (batch, n_output)
    assert jnp.allclose(out, ref, atol=1e-5, rtol=1e-5)

    # Second check: ragged batch > 8 exercises the balanced multi-tile grid
    # (2 "parallel" tiles for v7x) and the padded-last-tile path.
    x2 = jax.random.normal(kx2, (20, d_in), jnp.float32)
    out2 = jax.block_until_ready(estimator_forward(x2, slab, n_out=n_output))
    ref2 = _reference(x2, w1, b1, w2, b2, w3, b3)
    assert out2.shape == (20, n_output)
    assert jnp.allclose(out2, ref2, atol=1e-5, rtol=1e-5)

    print("KERNEL_OK")
</pallas_src>

<mosaic_0001>
module attributes {stable_mosaic.version = 11 : i64} {
  func.func @kernel(%arg0: i32, %arg1: memref<8x32xf32, #tpu.memory_space<vmem>>, %arg2: memref<296x128xf32, #tpu.memory_space<vmem>>, %arg3: memref<8x4xf32, #tpu.memory_space<vmem>>) attributes {dimension_semantics = [#tpu.dimension_semantics<parallel>], iteration_bounds = array<i64: 1>, scalar_prefetch = 0 : i64, scratch_operands = 0 : i64, tpu.core_type = #tpu.core_type<tc>, window_params = [{transform_indices = @transform_0, window_bounds = array<i64: 8, 32>}, {pipeline_mode = #tpu.pipeline_mode<synchronous>, transform_indices = @transform_1, window_bounds = array<i64: 296, 128>}, {transform_indices = @transform_2, window_bounds = array<i64: 8, 4>}]} {
    %c0 = arith.constant 0 : index
    %c0_0 = arith.constant 0 : index
    %0 = vector.load %arg2[%c0, %c0_0] : memref<296x128xf32, #tpu.memory_space<vmem>>, vector<32x128xf32>
    %c32 = arith.constant 32 : index
    %c0_1 = arith.constant 0 : index
    %1 = vector.load %arg2[%c32, %c0_1] : memref<296x128xf32, #tpu.memory_space<vmem>>, vector<128x128xf32>
    %c160 = arith.constant 160 : index
    %c0_2 = arith.constant 0 : index
    %2 = vector.load %arg2[%c160, %c0_2] : memref<296x128xf32, #tpu.memory_space<vmem>>, vector<128x128xf32>
    %c288 = arith.constant 288 : index
    %c0_3 = arith.constant 0 : index
    %3 = vector.load %arg2[%c288, %c0_3] : memref<296x128xf32, #tpu.memory_space<vmem>>, vector<8x128xf32>
    %4 = vector.extract_strided_slice %3 {offsets = [0, 0], sizes = [1, 128], strides = [1, 1]} : vector<8x128xf32> to vector<1x128xf32>
    %5 = vector.extract_strided_slice %3 {offsets = [1, 0], sizes = [1, 128], strides = [1, 1]} : vector<8x128xf32> to vector<1x128xf32>
    %6 = vector.extract_strided_slice %3 {offsets = [2, 0], sizes = [1, 128], strides = [1, 1]} : vector<8x128xf32> to vector<1x128xf32>
    %c0_4 = arith.constant 0 : index
    %c0_5 = arith.constant 0 : index
    %7 = vector.load %arg1[%c0_4, %c0_5] : memref<8x32xf32, #tpu.memory_space<vmem>>, vector<8x32xf32>
    %cst = arith.constant dense<0.000000e+00> : vector<8x128xf32>
    %8 = tpu.matmul %7, %0, %cst {dimension_numbers = #tpu.dot_dimension_numbers<[1], [0], [0], [1], [0, 0, 1, 1], [], []>} : vector<8x32xf32>, vector<32x128xf32>, vector<8x128xf32> -> vector<8x128xf32>
    %9 = vector.broadcast %4 : vector<1x128xf32> to vector<8x128xf32>
    %10 = arith.addf %8, %9 : vector<8x128xf32>
    %cst_6 = arith.constant 0.000000e+00 : f32
    %11 = vector.broadcast %cst_6 : f32 to vector<8x128xf32>
    %12 = arith.maximumf %10, %11 : vector<8x128xf32>
    %cst_7 = arith.constant dense<0.000000e+00> : vector<8x128xf32>
    %13 = tpu.matmul %12, %1, %cst_7 {dimension_numbers = #tpu.dot_dimension_numbers<[1], [0], [0], [1], [0, 0, 1, 1], [], []>} : vector<8x128xf32>, vector<128x128xf32>, vector<8x128xf32> -> vector<8x128xf32>
    %14 = vector.broadcast %5 : vector<1x128xf32> to vector<8x128xf32>
    %15 = arith.addf %13, %14 : vector<8x128xf32>
    %cst_8 = arith.constant 0.000000e+00 : f32
    %16 = vector.broadcast %cst_8 : f32 to vector<8x128xf32>
    %17 = arith.maximumf %15, %16 : vector<8x128xf32>
    %cst_9 = arith.constant dense<0.000000e+00> : vector<8x128xf32>
    %18 = tpu.matmul %17, %2, %cst_9 {dimension_numbers = #tpu.dot_dimension_numbers<[1], [0], [0], [1], [0, 0, 1, 1], [], []>} : vector<8x128xf32>, vector<128x128xf32>, vector<8x128xf32> -> vector<8x128xf32>
    %19 = vector.broadcast %6 : vector<1x128xf32> to vector<8x128xf32>
    %20 = arith.addf %18, %19 : vector<8x128xf32>
    %21 = vector.extract_strided_slice %20 {offsets = [0, 0], sizes = [8, 4], strides = [1, 1]} : vector<8x128xf32> to vector<8x4xf32>
    %c0_10 = arith.constant 0 : index
    %c0_11 = arith.constant 0 : index
    %22 = vector.load %arg3[%c0_10, %c0_11] : memref<8x4xf32, #tpu.memory_space<vmem>>, vector<8x4xf32>
    tpu.vector_store %arg3[%c0_10, %c0_11], %21 {strides = array<i32>} : memref<8x4xf32, #tpu.memory_space<vmem>>, vector<8x4xf32>,
    return
  }
  func.func @transform_0(%arg0: i32) -> (i32, i32) {
    %c0_i32 = arith.constant 0 : i32
    %c0_i32_0 = arith.constant 0 : i32
    return %arg0, %c0_i32 : i32, i32
  }
  func.func @transform_1(%arg0: i32) -> (i32, i32) {
    %c0_i32 = arith.constant 0 : i32
    %c0_i32_0 = arith.constant 0 : i32
    %c0_i32_1 = arith.constant 0 : i32
    return %c0_i32, %c0_i32_0 : i32, i32
  }
  func.func @transform_2(%arg0: i32) -> (i32, i32) {
    %c0_i32 = arith.constant 0 : i32
    %c0_i32_0 = arith.constant 0 : i32
    return %arg0, %c0_i32 : i32, i32
  }
}

</mosaic_0001>

<llo_original>
// kernel: estimator_forward.1
$region0: #{estimator_forward.1}
  #allocation0 [shape = 'u32[]', space=smem, size = 0x4, offset = 0x4, fixed_abs, tag = 'smem constant byte address 0x4 - core index']
  #allocation1 [shape = 'u32[144,128]{1,0:T(1,128)}', space=vmem, size = 0x12000, scoped, tag = 'internal scratch']
  %s0 = inlined_call_operand.hbm [shape: f32[8,32], index: 0, kind: input, shape index: {}]
  %s1 = inlined_call_operand.hbm [shape: f32[296,128], index: 1, kind: input, shape index: {}]
  %s2 = inlined_call_operand.vmem [shape: f32[8,4], index: 2, kind: output, shape index: {}]
  %s3 = sld [smem:[#allocation0]]
  $region26: #{estimator_forward.1} parent=0
    _
  %s5 = ssub.s32 1, %s3
  %s6 = scalar_select 0, %s5, %s3
  $region1: #{estimator_forward.1} parent=0
    #allocation2 [shape = 'u8[4096]{0}', space=vmem, size = 0x1000, scoped, tag = 'input window, operand 0, single buffered']
    #allocation3 [shape = 's32[1]{0}', space=sflag, size = 0x4, scoped, tag = 'scoped memory for estimator_forward.1']
    #allocation4 [shape = 'u8[151552]{0}', space=vmem, size = 0x25000, scoped, tag = 'input window, operand 1, single buffered']
    #allocation5 [shape = 's32[1]{0}', space=sflag, size = 0x4, scoped, tag = 'scoped memory for estimator_forward.1']
    %7 = vsyncpa [#allocation3], 0
    %8 = vsyncpa [#allocation5], 0
    // Predicated region
    $region2: #{estimator_forward.1} parent=1 // pred_check
      _
    $region3: #{estimator_forward.1} parent=1 // pred_check_branch
      %10 = sbr.rel (0) target = $region5
    $region4: #{estimator_forward.1} parent=1 // pred_region
      %s12 = ssub.s32 128, 128
      %13 = vsyncadd [#allocation3], %s12
      %s15 = sshll.u32 [#allocation2], 4
      %s16 = int_to_ptr.vmem [resolvable:$true] %s15
      %18 = dma.hbm_to_vmem [thread:$0]  %s0, 128, %s16, [#allocation3]
    $region5: #{estimator_forward.1} parent=1 // pred_fallthru
      _
    // Predicated region
    $region6: #{estimator_forward.1} parent=1 // pred_check
      _
    $region7: #{estimator_forward.1} parent=1 // pred_check_branch
      %20 = sbr.rel (0) target = $region9
    $region8: #{estimator_forward.1} parent=1 // pred_region
      %s22 = ssub.s32 4736, 4736
      %23 = vsyncadd [#allocation5], %s22
      %s24 = sshll.u32 [#allocation4], 4
      %s25 = int_to_ptr.vmem [resolvable:$true] %s24
      %30 = dma.hbm_to_vmem [thread:$0]  %s1, 4736, %s25, [#allocation5], 128, 128, 8
    $region9: #{estimator_forward.1} parent=1 // pred_fallthru
      _
    // Predicated region
    $region10: #{estimator_forward.1} parent=1 // pred_check
      _
    $region11: #{estimator_forward.1} parent=1 // pred_check_branch
      %32 = sbr.rel (0) target = $region13
    $region12: #{estimator_forward.1} parent=1 // pred_region
      %33 = dma.done [#allocation3], 128
    $region13: #{estimator_forward.1} parent=1 // pred_fallthru
      _
    // Predicated region
    $region14: #{estimator_forward.1} parent=1 // pred_check
      _
    $region15: #{estimator_forward.1} parent=1 // pred_check_branch
      %35 = sbr.rel (0) target = $region17
    $region16: #{estimator_forward.1} parent=1 // pred_region
      %36 = dma.done [#allocation5], 4736
    $region17: #{estimator_forward.1} parent=1 // pred_fallthru
      _
    %v37 = vld [vmem:[#allocation4] sm:$0xff]
    %v38 = vld [vmem:[#allocation4 + $0x8] sm:$0xff]
    %v39 = vld [vmem:[#allocation4 + $0x10] sm:$0xff]
    %v40 = vld [vmem:[#allocation4 + $0x18] sm:$0xff]
    %v41 = vld [vmem:[#allocation4 + $0x20] sm:$0xff]
    %v42 = vld [vmem:[#allocation4 + $0x28] sm:$0xff]
    %v43 = vld [vmem:[#allocation4 + $0x30] sm:$0xff]
    %v44 = vld [vmem:[#allocation4 + $0x38] sm:$0xff]
    %v45 = vld [vmem:[#allocation4 + $0x40] sm:$0xff]
    %v46 = vld [vmem:[#allocation4 + $0x48] sm:$0xff]
    %v47 = vld [vmem:[#allocation4 + $0x50] sm:$0xff]
    %v48 = vld [vmem:[#allocation4 + $0x58] sm:$0xff]
    %v49 = vld [vmem:[#allocation4 + $0x60] sm:$0xff]
    %v50 = vld [vmem:[#allocation4 + $0x68] sm:$0xff]
    %v51 = vld [vmem:[#allocation4 + $0x70] sm:$0xff]
    %v52 = vld [vmem:[#allocation4 + $0x78] sm:$0xff]
    %v53 = vld [vmem:[#allocation4 + $0x80] sm:$0xff]
    %v54 = vld [vmem:[#allocation4 + $0x88] sm:$0xff]
    %v55 = vld [vmem:[#allocation4 + $0x90] sm:$0xff]
    %v56 = vld [vmem:[#allocation4 + $0x98] sm:$0xff]
    %v57 = vld [vmem:[#allocation4 + $0xa0] sm:$0xff]
    %v58 = vld [vmem:[#allocation4 + $0xa8] sm:$0xff]
    %v59 = vld [vmem:[#allocation4 + $0xb0] sm:$0xff]
    %v60 = vld [vmem:[#allocation4 + $0xb8] sm:$0xff]
    %v61 = vld [vmem:[#allocation4 + $0xc0] sm:$0xff]
    %v62 = vld [vmem:[#allocation4 + $0xc8] sm:$0xff]
    %v63 = vld [vmem:[#allocation4 + $0xd0] sm:$0xff]
    %v64 = vld [vmem:[#allocation4 + $0xd8] sm:$0xff]
    %v65 = vld [vmem:[#allocation4 + $0xe0] sm:$0xff]
    %v66 = vld [vmem:[#allocation4 + $0xe8] sm:$0xff]
    %v67 = vld [vmem:[#allocation4 + $0xf0] sm:$0xff]
    %v68 = vld [vmem:[#allocation4 + $0xf8] sm:$0xff]
    %v69 = vld [vmem:[#allocation4 + $0x100] sm:$0xff]
    %v70 = vld [vmem:[#allocation4 + $0x108] sm:$0xff]
    %v71 = vld [vmem:[#allocation4 + $0x110] sm:$0xff]
    %v72 = vld [vmem:[#allocation4 + $0x118] sm:$0xff]
    %v73 = vld [vmem:[#allocation4 + $0x120] sm:$0xff]
    %v74 = vld [vmem:[#allocation2] sm:$0xff]
    %v75 = vlaneseq
    %v76 = vshrl.u32 %v75, 7
    %v77 = vsub.s32 0, %v76
    %v78 = vrot.slane %v73, %v77
    %vm79 = vcmask 261120
    %v81 = vsel %vm79, %v74, 0
    %83 = vmatprep.subr.mxu0 0.0
    %84 = vmatpush1.msra.mxu0 %v37
    %85 = vmatprep.subr.mxu0 0.0
    %86 = vmatpush1.msra.mxu0 %v38
    %87 = vmatprep.subr.mxu0 0.0
    %88 = vmatpush1.msra.mxu0 %v39
    %89 = vmatprep.subr.mxu0 0.0
    %90 = vmatpush1.msra.mxu0 %v40
    %91 = vmatprep.subr.mxu0 0.0
    %92 = vmatpush1.msra.mxu0 0.0
    %93 = vmatprep.subr.mxu0 0.0
    %94 = vmatpush1.msra.mxu0 0.0
    %95 = vmatprep.subr.mxu0 0.0
    %96 = vmatpush1.msra.mxu0 0.0
    %97 = vmatprep.subr.mxu0 0.0
    %98 = vmatpush1.msra.mxu0 0.0
    %99 = vmatprep.subr.mxu0 0.0
    %100 = vmatpush1.msra.mxu0 0.0
    %101 = vmatprep.subr.mxu0 0.0
    %102 = vmatpush1.msra.mxu0 0.0
    %103 = vmatprep.subr.mxu0 0.0
    %104 = vmatpush1.msra.mxu0 0.0
    %105 = vmatprep.subr.mxu0 0.0
    %106 = vmatpush1.msra.mxu0 0.0
    %107 = vmatprep.subr.mxu0 0.0
    %108 = vmatpush1.msra.mxu0 0.0
    %109 = vmatprep.subr.mxu0 0.0
    %110 = vmatpush1.msra.mxu0 0.0
    %111 = vmatprep.subr.mxu0 0.0
    %112 = vmatpush1.msra.mxu0 0.0
    %113 = vmatprep.subr.mxu0 0.0
    %114 = vmatpush1.msra.mxu0 0.0
    %115 = vmatprep.subr.mxu0 0.0
    %116 = vmatpush1.msra.mxu0 0.0
    %117 = vmatprep.subr.mxu0 0.0
    %118 = vmatpush1.msra.mxu0 0.0
    %119 = vmatprep.subr.mxu0 0.0
    %120 = vmatpush1.msra.mxu0 0.0
    %121 = vmatprep.subr.mxu0 0.0
    %122 = vmatpush1.msra.mxu0 0.0
    %123 = vmatprep.subr.mxu0 0.0
    %124 = vmatpush1.msra.mxu0 0.0
    %125 = vmatprep.subr.mxu0 0.0
    %126 = vmatpush1.msra.mxu0 0.0
    %127 = vmatprep.subr.mxu0 0.0
    %128 = vmatpush1.msra.mxu0 0.0
    %129 = vmatprep.subr.mxu0 0.0
    %130 = vmatpush1.msra.mxu0 0.0
    %131 = vmatprep.subr.mxu0 0.0
    %132 = vmatpush1.msra.mxu0 0.0
    %133 = vmatprep.subr.mxu0 0.0
    %134 = vmatpush1.msra.mxu0 0.0
    %135 = vmatprep.subr.mxu0 0.0
    %136 = vmatpush1.msra.mxu0 0.0
    %137 = vmatprep.subr.mxu0 0.0
    %138 = vmatpush1.msra.mxu0 0.0
    %139 = vmatprep.subr.mxu0 0.0
    %140 = vmatpush1.msra.mxu0 0.0
    %141 = vmatprep.subr.mxu0 0.0
    %142 = vmatpush1.msra.mxu0 0.0
    %143 = vmatprep.subr.mxu0 0.0
    %144 = vmatpush1.msra.mxu0 0.0
    %145 = vmatprep.subr.mxu0 0.0
    %146 = vmatpush1.msra.mxu0 0.0
    %147 = vmatprep.mubr.f32.mxu0 0.0
    %148 = vmatmul.mubr.f32.gmra.mrb[0].mxu0 %v81
    %v149 = vpop.f32.mrb[0].mxu0
    %v150 = vadd.f32 %v78, %v149
    %v151 = vpop.f32.mrb[0].mxu0
    %152 = vdwg.mxu0
    %v153 = vmax.f32 %v150, 0.0
    %v154 = vlaneseq
    %v155 = vshrl.u32 %v154, 7
    %v156 = vsub.s32 1, %v155
    %v157 = vrot.slane %v73, %v156
    %158 = vmatprep.subr.mxu0 0.0
    %159 = vmatpush1.msra.mxu0 %v41
    %160 = vmatprep.subr.mxu0 0.0
    %161 = vmatpush1.msra.mxu0 %v42
    %162 = vmatprep.subr.mxu0 0.0
    %163 = vmatpush1.msra.mxu0 %v43
    %164 = vmatprep.subr.mxu0 0.0
    %165 = vmatpush1.msra.mxu0 %v44
    %166 = vmatprep.subr.mxu0 0.0
    %167 = vmatpush1.msra.mxu0 %v45
    %168 = vmatprep.subr.mxu0 0.0
    %169 = vmatpush1.msra.mxu0 %v46
    %170 = vmatprep.subr.mxu0 0.0
    %171 = vmatpush1.msra.mxu0 %v47
    %172 = vmatprep.subr.mxu0 0.0
    %173 = vmatpush1.msra.mxu0 %v48
    %174 = vmatprep.subr.mxu0 0.0
    %175 = vmatpush1.msra.mxu0 %v49
    %176 = vmatprep.subr.mxu0 0.0
    %177 = vmatpush1.msra.mxu0 %v50
    %178 = vmatprep.subr.mxu0 0.0
    %179 = vmatpush1.msra.mxu0 %v51
    %180 = vmatprep.subr.mxu0 0.0
    %181 = vmatpush1.msra.mxu0 %v52
    %182 = vmatprep.subr.mxu0 0.0
    %183 = vmatpush1.msra.mxu0 %v53
    %184 = vmatprep.subr.mxu0 0.0
    %185 = vmatpush1.msra.mxu0 %v54
    %186 = vmatprep.subr.mxu0 0.0
    %187 = vmatpush1.msra.mxu0 %v55
    %188 = vmatprep.subr.mxu0 0.0
    %189 = vmatpush1.msra.mxu0 %v56
    %190 = vmatprep.subr.mxu0 0.0
    %191 = vmatpush1.msra.mxu0 0.0
    %192 = vmatprep.subr.mxu0 0.0
    %193 = vmatpush1.msra.mxu0 0.0
    %194 = vmatprep.subr.mxu0 0.0
    %195 = vmatpush1.msra.mxu0 0.0
    %196 = vmatprep.subr.mxu0 0.0
    %197 = vmatpush1.msra.mxu0 0.0
    %198 = vmatprep.subr.mxu0 0.0
    %199 = vmatpush1.msra.mxu0 0.0
    %200 = vmatprep.subr.mxu0 0.0
    %201 = vmatpush1.msra.mxu0 0.0
    %202 = vmatprep.subr.mxu0 0.0
    %203 = vmatpush1.msra.mxu0 0.0
    %204 = vmatprep.subr.mxu0 0.0
    %205 = vmatpush1.msra.mxu0 0.0
    %206 = vmatprep.subr.mxu0 0.0
    %207 = vmatpush1.msra.mxu0 0.0
    %208 = vmatprep.subr.mxu0 0.0
    %209 = vmatpush1.msra.mxu0 0.0
    %210 = vmatprep.subr.mxu0 0.0
    %211 = vmatpush1.msra.mxu0 0.0
    %212 = vmatprep.subr.mxu0 0.0
    %213 = vmatpush1.msra.mxu0 0.0
    %214 = vmatprep.subr.mxu0 0.0
    %215 = vmatpush1.msra.mxu0 0.0
    %216 = vmatprep.subr.mxu0 0.0
    %217 = vmatpush1.msra.mxu0 0.0
    %218 = vmatprep.subr.mxu0 0.0
    %219 = vmatpush1.msra.mxu0 0.0
    %220 = vmatprep.subr.mxu0 0.0
    %221 = vmatpush1.msra.mxu0 0.0
    %222 = vmatprep.mubr.f32.mxu0 0.0
    %223 = vmatmul.mubr.f32.gmra.mrb[0].mxu0 %v153
    %v224 = vpop.f32.mrb[0].mxu0
    %v225 = vadd.f32 %v157, %v224
    %v226 = vpop.f32.mrb[0].mxu0
    %227 = vdwg.mxu0
    %v228 = vmax.f32 %v225, 0.0
    %v229 = vlaneseq
    %v230 = vshrl.u32 %v229, 7
    %v231 = vsub.s32 2, %v230
    %v232 = vrot.slane %v73, %v231
    %233 = vmatprep.subr.mxu0 0.0
    %234 = vmatpush1.msra.mxu0 %v57
    %235 = vmatprep.subr.mxu0 0.0
    %236 = vmatpush1.msra.mxu0 %v58
    %237 = vmatprep.subr.mxu0 0.0
    %238 = vmatpush1.msra.mxu0 %v59
    %239 = vmatprep.subr.mxu0 0.0
    %240 = vmatpush1.msra.mxu0 %v60
    %241 = vmatprep.subr.mxu0 0.0
    %242 = vmatpush1.msra.mxu0 %v61
    %243 = vmatprep.subr.mxu0 0.0
    %244 = vmatpush1.msra.mxu0 %v62
    %245 = vmatprep.subr.mxu0 0.0
    %246 = vmatpush1.msra.mxu0 %v63
    %247 = vmatprep.subr.mxu0 0.0
    %248 = vmatpush1.msra.mxu0 %v64
    %249 = vmatprep.subr.mxu0 0.0
    %250 = vmatpush1.msra.mxu0 %v65
    %251 = vmatprep.subr.mxu0 0.0
    %252 = vmatpush1.msra.mxu0 %v66
    %253 = vmatprep.subr.mxu0 0.0
    %254 = vmatpush1.msra.mxu0 %v67
    %255 = vmatprep.subr.mxu0 0.0
    %256 = vmatpush1.msra.mxu0 %v68
    %257 = vmatprep.subr.mxu0 0.0
    %258 = vmatpush1.msra.mxu0 %v69
    %259 = vmatprep.subr.mxu0 0.0
    %260 = vmatpush1.msra.mxu0 %v70
    %261 = vmatprep.subr.mxu0 0.0
    %262 = vmatpush1.msra.mxu0 %v71
    %263 = vmatprep.subr.mxu0 0.0
    %264 = vmatpush1.msra.mxu0 %v72
    %265 = vmatprep.subr.mxu0 0.0
    %266 = vmatpush1.msra.mxu0 0.0
    %267 = vmatprep.subr.mxu0 0.0
    %268 = vmatpush1.msra.mxu0 0.0
    %269 = vmatprep.subr.mxu0 0.0
    %270 = vmatpush1.msra.mxu0 0.0
    %271 = vmatprep.subr.mxu0 0.0
    %272 = vmatpush1.msra.mxu0 0.0
    %273 = vmatprep.subr.mxu0 0.0
    %274 = vmatpush1.msra.mxu0 0.0
    %275 = vmatprep.subr.mxu0 0.0
    %276 = vmatpush1.msra.mxu0 0.0
    %277 = vmatprep.subr.mxu0 0.0
    %278 = vmatpush1.msra.mxu0 0.0
    %279 = vmatprep.subr.mxu0 0.0
    %280 = vmatpush1.msra.mxu0 0.0
    %281 = vmatprep.subr.mxu0 0.0
    %282 = vmatpush1.msra.mxu0 0.0
    %283 = vmatprep.subr.mxu0 0.0
    %284 = vmatpush1.msra.mxu0 0.0
    %285 = vmatprep.subr.mxu0 0.0
    %286 = vmatpush1.msra.mxu0 0.0
    %287 = vmatprep.subr.mxu0 0.0
    %288 = vmatpush1.msra.mxu0 0.0
    %289 = vmatprep.subr.mxu0 0.0
    %290 = vmatpush1.msra.mxu0 0.0
    %291 = vmatprep.subr.mxu0 0.0
    %292 = vmatpush1.msra.mxu0 0.0
    %293 = vmatprep.subr.mxu0 0.0
    %294 = vmatpush1.msra.mxu0 0.0
    %295 = vmatprep.subr.mxu0 0.0
    %296 = vmatpush1.msra.mxu0 0.0
    %297 = vmatprep.mubr.f32.mxu0 0.0
    %298 = vmatmul.mubr.f32.gmra.mrb[0].mxu0 %v228
    %v299 = vpop.f32.mrb[0].mxu0
    %v300 = vadd.f32 %v232, %v299
    %v301 = vpop.f32.mrb[0].mxu0
    %302 = vdwg.mxu0
    %vm303 = vcmask 31744
    %304 = vst.msk [vmem:[%s2] sm:$0xff] %vm303, %v300
    // Predicated region
    $region18: #{estimator_forward.1} parent=1 // pred_check
      _
    $region19: #{estimator_forward.1} parent=1 // pred_check_branch
      %306 = sbr.rel (0) target = $region21
    $region20: #{estimator_forward.1} parent=1 // pred_region
      _
    $region21: #{estimator_forward.1} parent=1 // pred_fallthru
      _
    // Predicated region
    $region22: #{estimator_forward.1} parent=1 // pred_check
      _
    $region23: #{estimator_forward.1} parent=1 // pred_check_branch
      %308 = sbr.rel (0) target = $region25
    $region24: #{estimator_forward.1} parent=1 // pred_region
      _
    $region25: #{estimator_forward.1} parent=1 // pred_fallthru
      _
    %309 = vsyncpa [#allocation3], 1
    %310 = vsyncpa [#allocation5], 1

</llo_original>
